<compile_context>
chip_gen: v6e
topology: v6e:2x2x1
jax: 0.10.0
libtpu: 0.0.40
codegen_flags: <defaults>
</compile_context>

<pallas_src>
import functools
import jax
import jax.numpy as jnp
from jax import lax
from jax.experimental import pallas as pl
from jax.experimental.pallas import tpu as pltpu


# ----------------------------- Pallas kernel ----------------------------- #

def bae_forward_kernel(x_ref, w0_ref, w1_ref, w2_ref, w3_ref, b_ref, tau_ref,
                       loc_ref, scale_ref, *, hidden, in_dim):
    # Activations are (features, batch_tile): batch on lanes, features on sublanes.
    x = x_ref[...]                                             # (in_dim, nb)

    h = jnp.dot(w0_ref[...], x, preferred_element_type=jnp.float32)
    h = jnp.maximum(h + b_ref[0:hidden, :], 0.0)               # linear_0 + relu_0

    h = jnp.dot(w1_ref[...], h, preferred_element_type=jnp.float32)
    h = jnp.maximum(h + b_ref[hidden:2 * hidden, :], 0.0)      # linear_1 + relu_1

    h = jnp.dot(w2_ref[...], h, preferred_element_type=jnp.float32)
    h = jnp.maximum(h + b_ref[2 * hidden:3 * hidden, :], 0.0)  # linear_2 + relu_2

    z = jnp.dot(w3_ref[...], h, preferred_element_type=jnp.float32)
    z = z + b_ref[3 * hidden:3 * hidden + in_dim, :]           # linear_3

    # X = 1.2 * sigmoid(X) - 0.1
    loc_ref[...] = (1.2 * jax.nn.sigmoid(z) - 0.1).astype(loc_ref.dtype)
    # scale = 1 / sqrt(tau)  ->  rsqrt on the EUP
    scale_ref[...] = lax.rsqrt(tau_ref[...]).astype(scale_ref.dtype)


def bae_pallas(XT, Ws, b_cat, tauT, nb_max=512):
    """XT: (in_dim, n_obs) transposed input; Ws[l]: (out_l, in_l) PyTorch layout;
    b_cat: (sum(out_l), 1) concatenated column biases; tauT: (in_dim, n_obs)."""
    in_dim, n_obs = XT.shape
    hidden = Ws[0].shape[0]
    assert len(Ws) == 4, "kernel is specialized to 3 hidden layers + output (module default)"

    if n_obs <= nb_max:
        nb, n_pad = n_obs, n_obs                     # single block, full extent
    else:
        nb = nb_max                                  # lane-dense batch tiles (mult. of 128)
        n_pad = pl.cdiv(n_obs, nb) * nb
        pad = n_pad - n_obs
        XT = jnp.pad(XT, ((0, 0), (0, pad)))
        tauT = jnp.pad(tauT, ((0, 0), (0, pad)), constant_values=1.0)

    batch_spec = pl.BlockSpec((in_dim, nb), lambda i: (0, i))
    full_spec = lambda shape: pl.BlockSpec(shape, lambda i: (0, 0))

    in_specs = ([batch_spec]
                + [full_spec(W.shape) for W in Ws]
                + [full_spec(b_cat.shape), batch_spec])
    out_specs = (batch_spec, batch_spec)
    out_shape = (jax.ShapeDtypeStruct((in_dim, n_pad), jnp.float32),
                 jax.ShapeDtypeStruct((in_dim, n_pad), jnp.float32))

    locT, scaleT = pl.pallas_call(
        functools.partial(bae_forward_kernel, hidden=hidden, in_dim=in_dim),
        grid=(n_pad // nb,),
        in_specs=in_specs,
        out_specs=out_specs,
        out_shape=out_shape,
        compiler_params=pltpu.CompilerParams(dimension_semantics=("parallel",)),
    )(XT, *Ws, b_cat, tauT)
    return locT[:, :n_obs], scaleT[:, :n_obs]


# ------------------------------ JAX glue --------------------------------- #

def softplus_threshold(x, threshold=0.01):
    # torch.nn.functional.softplus(x, beta=1, threshold): linear where x > threshold.
    # jax.nn.softplus is overflow-safe, so the discarded branch never produces inf/NaN.
    return jnp.where(x > threshold, x, jax.nn.softplus(x))


def init_params(key, in_dim, n_obs, hidden_dim=24, n_hidden=3,
                prior_mu=0.0, prior_sigma=0.1):
    """Deterministic synthetic init matching the module's parameter shapes."""
    dims = [in_dim] + [hidden_dim] * n_hidden + [in_dim]
    layers = []
    keys = jax.random.split(key, len(dims) - 1)
    for l in range(len(dims) - 1):
        d_in, d_out = dims[l], dims[l + 1]
        kw, kb = jax.random.split(keys[l])
        layers.append({
            # PyTorch BayesLinear parameter layout: weight_mu is (out_features, in_features)
            'weight_mu': prior_mu + 0.1 * jax.random.normal(kw, (d_out, d_in), jnp.float32),
            'weight_log_sigma': jnp.full((d_out, d_in), jnp.log(prior_sigma), jnp.float32),
            'bias_mu': prior_mu + 0.1 * jax.random.normal(kb, (d_out,), jnp.float32),
            'bias_log_sigma': jnp.full((d_out,), jnp.log(prior_sigma), jnp.float32),
        })
    params = {
        'layers': layers,
        'gamma_concentration': jnp.zeros((n_obs, in_dim), jnp.float32) + 12.0 * n_obs ** 2,
        'gamma_rate': jnp.ones((n_obs, in_dim), jnp.float32),
    }
    return params


def _bayesian_autoencoder_forward(params, X, y, key):
    """Reproduces BayesianAutoencoder.forward: returns pred loc/scale and target."""
    n_layers = len(params['layers'])
    keys = jax.random.split(key, 2 * n_layers + 1)

    # BayesLinear forward: W = mu + exp(log_sigma) * eps (reparameterization, per call).
    # Weights stay in PyTorch (out, in) layout: the kernel computes W @ h directly.
    ws, bs = [], []
    for i, layer in enumerate(params['layers']):
        eps_w = jax.random.normal(keys[2 * i], layer['weight_mu'].shape, jnp.float32)
        eps_b = jax.random.normal(keys[2 * i + 1], layer['bias_mu'].shape, jnp.float32)
        W_pt = layer['weight_mu'] + jnp.exp(layer['weight_log_sigma']) * eps_w   # (out, in)
        b = layer['bias_mu'] + jnp.exp(layer['bias_log_sigma']) * eps_b
        ws.append(W_pt)
        bs.append(b.reshape(-1, 1))                  # column bias for (features, batch) layout
    b_cat = jnp.concatenate(bs, axis=0)              # one (sum(out), 1) VMEM input

    # Gamma(softplus(conc), softplus(rate)).rsample()
    conc = softplus_threshold(params['gamma_concentration'])
    rate = softplus_threshold(params['gamma_rate'])
    # TODO(synk): Gamma sampling has no Pallas equivalent; drawn with jax.random.gamma in glue.
    tau = jax.random.gamma(keys[-1], conc) / rate

    # Transposed hot-path layout: batch on the lane axis.
    locT, scaleT = bae_pallas(X.T, ws, b_cat, tau.T)
    return {'pred_loc': locT.T, 'pred_scale': scaleT.T, 'target': y}


# Single dispatch for the whole forward (sampling + transposes + pallas_call).
bayesian_autoencoder_forward = jax.jit(_bayesian_autoencoder_forward)


# -------------------------------- main ------------------------------------ #

if __name__ == "__main__":
    in_dim, n_obs, hidden_dim, n_hidden = 8, 16, 24, 3

    key = jax.random.PRNGKey(0)
    k_param, k_x, k_fwd = jax.random.split(key, 3)

    params = init_params(k_param, in_dim, n_obs, hidden_dim, n_hidden)
    X = jax.random.uniform(k_x, (n_obs, in_dim), jnp.float32)   # autoencoder: y == X target
    y = X

    out = bayesian_autoencoder_forward(params, X, y, k_fwd)
    jax.block_until_ready(out)

    assert out['pred_loc'].shape == (n_obs, in_dim)
    assert out['pred_scale'].shape == (n_obs, in_dim)
    assert bool(jnp.all(jnp.isfinite(out['pred_loc'])))
    print("KERNEL_OK")
</pallas_src>

<mosaic_0001>
module attributes {stable_mosaic.version = 11 : i64} {
  func.func @bae_forward_kernel(%arg0: i32, %arg1: memref<8x16xf32, #tpu.memory_space<vmem>>, %arg2: memref<24x8xf32, #tpu.memory_space<vmem>>, %arg3: memref<24x24xf32, #tpu.memory_space<vmem>>, %arg4: memref<24x24xf32, #tpu.memory_space<vmem>>, %arg5: memref<8x24xf32, #tpu.memory_space<vmem>>, %arg6: memref<80x1xf32, #tpu.memory_space<vmem>>, %arg7: memref<8x16xf32, #tpu.memory_space<vmem>>, %arg8: memref<8x16xf32, #tpu.memory_space<vmem>>, %arg9: memref<8x16xf32, #tpu.memory_space<vmem>>) attributes {dimension_semantics = [#tpu.dimension_semantics<parallel>], iteration_bounds = array<i64: 1>, scalar_prefetch = 0 : i64, scratch_operands = 0 : i64, tpu.core_type = #tpu.core_type<tc>, window_params = [{transform_indices = @transform_0, window_bounds = array<i64: 8, 16>}, {pipeline_mode = #tpu.pipeline_mode<synchronous>, transform_indices = @transform_1, window_bounds = array<i64: 24, 8>}, {pipeline_mode = #tpu.pipeline_mode<synchronous>, transform_indices = @transform_2, window_bounds = array<i64: 24, 24>}, {pipeline_mode = #tpu.pipeline_mode<synchronous>, transform_indices = @transform_3, window_bounds = array<i64: 24, 24>}, {pipeline_mode = #tpu.pipeline_mode<synchronous>, transform_indices = @transform_4, window_bounds = array<i64: 8, 24>}, {pipeline_mode = #tpu.pipeline_mode<synchronous>, transform_indices = @transform_5, window_bounds = array<i64: 80, 1>}, {transform_indices = @transform_6, window_bounds = array<i64: 8, 16>}, {transform_indices = @transform_7, window_bounds = array<i64: 8, 16>}, {transform_indices = @transform_8, window_bounds = array<i64: 8, 16>}]} {
    %c0 = arith.constant 0 : index
    %c0_0 = arith.constant 0 : index
    %0 = vector.load %arg1[%c0, %c0_0] : memref<8x16xf32, #tpu.memory_space<vmem>>, vector<8x16xf32>
    %c0_1 = arith.constant 0 : index
    %c0_2 = arith.constant 0 : index
    %1 = vector.load %arg2[%c0_1, %c0_2] : memref<24x8xf32, #tpu.memory_space<vmem>>, vector<24x8xf32>
    %cst = arith.constant dense<0.000000e+00> : vector<24x16xf32>
    %2 = tpu.matmul %1, %0, %cst {dimension_numbers = #tpu.dot_dimension_numbers<[1], [0], [0], [1], [0, 0, 1, 1], [], []>} : vector<24x8xf32>, vector<8x16xf32>, vector<24x16xf32> -> vector<24x16xf32>
    %c0_3 = arith.constant 0 : index
    %c0_4 = arith.constant 0 : index
    %3 = vector.load %arg6[%c0_3, %c0_4] : memref<80x1xf32, #tpu.memory_space<vmem>>, vector<24x1xf32>
    %4 = vector.broadcast %3 : vector<24x1xf32> to vector<24x16xf32>
    %5 = arith.addf %2, %4 : vector<24x16xf32>
    %cst_5 = arith.constant 0.000000e+00 : f32
    %6 = vector.broadcast %cst_5 : f32 to vector<24x16xf32>
    %7 = arith.maximumf %5, %6 : vector<24x16xf32>
    %c0_6 = arith.constant 0 : index
    %c0_7 = arith.constant 0 : index
    %8 = vector.load %arg3[%c0_6, %c0_7] : memref<24x24xf32, #tpu.memory_space<vmem>>, vector<24x24xf32>
    %cst_8 = arith.constant dense<0.000000e+00> : vector<24x16xf32>
    %9 = tpu.matmul %8, %7, %cst_8 {dimension_numbers = #tpu.dot_dimension_numbers<[1], [0], [0], [1], [0, 0, 1, 1], [], []>} : vector<24x24xf32>, vector<24x16xf32>, vector<24x16xf32> -> vector<24x16xf32>
    %c24 = arith.constant 24 : index
    %c0_9 = arith.constant 0 : index
    %10 = vector.load %arg6[%c24, %c0_9] : memref<80x1xf32, #tpu.memory_space<vmem>>, vector<24x1xf32>
    %11 = vector.broadcast %10 : vector<24x1xf32> to vector<24x16xf32>
    %12 = arith.addf %9, %11 : vector<24x16xf32>
    %cst_10 = arith.constant 0.000000e+00 : f32
    %13 = vector.broadcast %cst_10 : f32 to vector<24x16xf32>
    %14 = arith.maximumf %12, %13 : vector<24x16xf32>
    %c0_11 = arith.constant 0 : index
    %c0_12 = arith.constant 0 : index
    %15 = vector.load %arg4[%c0_11, %c0_12] : memref<24x24xf32, #tpu.memory_space<vmem>>, vector<24x24xf32>
    %cst_13 = arith.constant dense<0.000000e+00> : vector<24x16xf32>
    %16 = tpu.matmul %15, %14, %cst_13 {dimension_numbers = #tpu.dot_dimension_numbers<[1], [0], [0], [1], [0, 0, 1, 1], [], []>} : vector<24x24xf32>, vector<24x16xf32>, vector<24x16xf32> -> vector<24x16xf32>
    %c48 = arith.constant 48 : index
    %c0_14 = arith.constant 0 : index
    %17 = vector.load %arg6[%c48, %c0_14] : memref<80x1xf32, #tpu.memory_space<vmem>>, vector<24x1xf32>
    %18 = vector.broadcast %17 : vector<24x1xf32> to vector<24x16xf32>
    %19 = arith.addf %16, %18 : vector<24x16xf32>
    %cst_15 = arith.constant 0.000000e+00 : f32
    %20 = vector.broadcast %cst_15 : f32 to vector<24x16xf32>
    %21 = arith.maximumf %19, %20 : vector<24x16xf32>
    %c0_16 = arith.constant 0 : index
    %c0_17 = arith.constant 0 : index
    %22 = vector.load %arg5[%c0_16, %c0_17] : memref<8x24xf32, #tpu.memory_space<vmem>>, vector<8x24xf32>
    %cst_18 = arith.constant dense<0.000000e+00> : vector<8x16xf32>
    %23 = tpu.matmul %22, %21, %cst_18 {dimension_numbers = #tpu.dot_dimension_numbers<[1], [0], [0], [1], [0, 0, 1, 1], [], []>} : vector<8x24xf32>, vector<24x16xf32>, vector<8x16xf32> -> vector<8x16xf32>
    %c72 = arith.constant 72 : index
    %c0_19 = arith.constant 0 : index
    %24 = vector.load %arg6[%c72, %c0_19] : memref<80x1xf32, #tpu.memory_space<vmem>>, vector<8x1xf32>
    %25 = vector.broadcast %24 : vector<8x1xf32> to vector<8x16xf32>
    %26 = arith.addf %23, %25 : vector<8x16xf32>
    %27 = arith.negf %26 : vector<8x16xf32>
    %28 = math.exp %27 : vector<8x16xf32>
    %cst_20 = arith.constant 1.000000e+00 : f32
    %29 = vector.broadcast %cst_20 : f32 to vector<8x16xf32>
    %30 = arith.addf %29, %28 : vector<8x16xf32>
    %31 = arith.divf %29, %30 : vector<8x16xf32>
    %cst_21 = arith.constant 1.200000e+00 : f32
    %32 = vector.broadcast %cst_21 : f32 to vector<8x16xf32>
    %33 = arith.mulf %32, %31 : vector<8x16xf32>
    %cst_22 = arith.constant 1.000000e-01 : f32
    %34 = vector.broadcast %cst_22 : f32 to vector<8x16xf32>
    %35 = arith.subf %33, %34 : vector<8x16xf32>
    %c0_23 = arith.constant 0 : index
    %c0_24 = arith.constant 0 : index
    %36 = vector.load %arg8[%c0_23, %c0_24] : memref<8x16xf32, #tpu.memory_space<vmem>>, vector<8x16xf32>
    tpu.vector_store %arg8[%c0_23, %c0_24], %35 {strides = array<i32>} : memref<8x16xf32, #tpu.memory_space<vmem>>, vector<8x16xf32>,
    %c0_25 = arith.constant 0 : index
    %c0_26 = arith.constant 0 : index
    %37 = vector.load %arg7[%c0_25, %c0_26] : memref<8x16xf32, #tpu.memory_space<vmem>>, vector<8x16xf32>
    %38 = math.rsqrt %37 : vector<8x16xf32>
    %c0_27 = arith.constant 0 : index
    %c0_28 = arith.constant 0 : index
    %39 = vector.load %arg9[%c0_27, %c0_28] : memref<8x16xf32, #tpu.memory_space<vmem>>, vector<8x16xf32>
    tpu.vector_store %arg9[%c0_27, %c0_28], %38 {strides = array<i32>} : memref<8x16xf32, #tpu.memory_space<vmem>>, vector<8x16xf32>,
    return
  }
  func.func @transform_0(%arg0: i32) -> (i32, i32) {
    %c0_i32 = arith.constant 0 : i32
    %c0_i32_0 = arith.constant 0 : i32
    return %c0_i32, %arg0 : i32, i32
  }
  func.func @transform_1(%arg0: i32) -> (i32, i32) {
    %c0_i32 = arith.constant 0 : i32
    %c0_i32_0 = arith.constant 0 : i32
    %c0_i32_1 = arith.constant 0 : i32
    return %c0_i32, %c0_i32_0 : i32, i32
  }
  func.func @transform_2(%arg0: i32) -> (i32, i32) {
    %c0_i32 = arith.constant 0 : i32
    %c0_i32_0 = arith.constant 0 : i32
    %c0_i32_1 = arith.constant 0 : i32
    return %c0_i32, %c0_i32_0 : i32, i32
  }
  func.func @transform_3(%arg0: i32) -> (i32, i32) {
    %c0_i32 = arith.constant 0 : i32
    %c0_i32_0 = arith.constant 0 : i32
    %c0_i32_1 = arith.constant 0 : i32
    return %c0_i32, %c0_i32_0 : i32, i32
  }
  func.func @transform_4(%arg0: i32) -> (i32, i32) {
    %c0_i32 = arith.constant 0 : i32
    %c0_i32_0 = arith.constant 0 : i32
    %c0_i32_1 = arith.constant 0 : i32
    return %c0_i32, %c0_i32_0 : i32, i32
  }
  func.func @transform_5(%arg0: i32) -> (i32, i32) {
    %c0_i32 = arith.constant 0 : i32
    %c0_i32_0 = arith.constant 0 : i32
    %c0_i32_1 = arith.constant 0 : i32
    return %c0_i32, %c0_i32_0 : i32, i32
  }
  func.func @transform_6(%arg0: i32) -> (i32, i32) {
    %c0_i32 = arith.constant 0 : i32
    %c0_i32_0 = arith.constant 0 : i32
    return %c0_i32, %arg0 : i32, i32
  }
  func.func @transform_7(%arg0: i32) -> (i32, i32) {
    %c0_i32 = arith.constant 0 : i32
    %c0_i32_0 = arith.constant 0 : i32
    return %c0_i32, %arg0 : i32, i32
  }
  func.func @transform_8(%arg0: i32) -> (i32, i32) {
    %c0_i32 = arith.constant 0 : i32
    %c0_i32_0 = arith.constant 0 : i32
    return %c0_i32, %arg0 : i32, i32
  }
}

</mosaic_0001>

<llo_original>
// kernel: _bayesian_autoencoder_forward.3
$region0: #{_bayesian_autoencoder_forward.3}
  #allocation0 [shape = 'u32[]', space=smem, size = 0x4, offset = 0x4, fixed_abs, tag = 'smem constant byte address 0x4 - core index']
  #allocation1 [shape = 'u32[144,128]{1,0:T(1,128)}', space=vmem, size = 0x12000, scoped, tag = 'internal scratch']
  %s0 = inlined_call_operand.vmem [shape: f32[8,16], index: 0, kind: input, shape index: {}]
  %s1 = inlined_call_operand.vmem [shape: f32[24,8], index: 1, kind: input, shape index: {}]
  %s2 = inlined_call_operand.vmem [shape: f32[24,24], index: 2, kind: input, shape index: {}]
  %s3 = inlined_call_operand.vmem [shape: f32[24,24], index: 3, kind: input, shape index: {}]
  %s4 = inlined_call_operand.vmem [shape: f32[8,24], index: 4, kind: input, shape index: {}]
  %s5 = inlined_call_operand.vmem [shape: f32[80,1], index: 5, kind: input, shape index: {}]
  %s6 = inlined_call_operand.vmem [shape: f32[8,16], index: 6, kind: input, shape index: {}]
  %s7 = inlined_call_operand.hbm [shape: f32[8,16], index: 7, kind: output, shape index: {0}]
  %s8 = inlined_call_operand.hbm [shape: f32[8,16], index: 8, kind: output, shape index: {1}]
  %9 = xla_tuple %s7, %s8
  %s10 = sld [smem:[#allocation0]]
  $region46: #{_bayesian_autoencoder_forward.3} parent=0
    _
  %s12 = ssub.s32 1, %s10
  %s13 = scalar_select 0, %s12, %s10
  $region1: #{_bayesian_autoencoder_forward.3} parent=0
    #allocation2 [shape = 'u8[4096]{0}', space=vmem, size = 0x1000, scoped, tag = 'output window, operand 0, single buffered']
    #allocation3 [shape = 's32[1]{0}', space=sflag, size = 0x4, scoped, tag = 'scoped memory for _bayesian_autoencoder_forward.3']
    #allocation4 [shape = 'u8[4096]{0}', space=vmem, size = 0x1000, scoped, tag = 'output window, operand 1, single buffered']
    #allocation5 [shape = 's32[1]{0}', space=sflag, size = 0x4, scoped, tag = 'scoped memory for _bayesian_autoencoder_forward.3']
    %14 = vsyncpa [#allocation3], 0
    %15 = vsyncpa [#allocation5], 0
    // Predicated region
    $region2: #{_bayesian_autoencoder_forward.3} parent=1 // pred_check
      _
    $region3: #{_bayesian_autoencoder_forward.3} parent=1 // pred_check_branch
      %17 = sbr.rel (0) target = $region5
    $region4: #{_bayesian_autoencoder_forward.3} parent=1 // pred_region
      _
    $region5: #{_bayesian_autoencoder_forward.3} parent=1 // pred_fallthru
      _
    // Predicated region
    $region6: #{_bayesian_autoencoder_forward.3} parent=1 // pred_check
      _
    $region7: #{_bayesian_autoencoder_forward.3} parent=1 // pred_check_branch
      %19 = sbr.rel (0) target = $region9
    $region8: #{_bayesian_autoencoder_forward.3} parent=1 // pred_region
      _
    $region9: #{_bayesian_autoencoder_forward.3} parent=1 // pred_fallthru
      _
    // Predicated region
    $region10: #{_bayesian_autoencoder_forward.3} parent=1 // pred_check
      _
    $region11: #{_bayesian_autoencoder_forward.3} parent=1 // pred_check_branch
      %21 = sbr.rel (0) target = $region13
    $region12: #{_bayesian_autoencoder_forward.3} parent=1 // pred_region
      _
    $region13: #{_bayesian_autoencoder_forward.3} parent=1 // pred_fallthru
      _
    // Predicated region
    $region14: #{_bayesian_autoencoder_forward.3} parent=1 // pred_check
      _
    $region15: #{_bayesian_autoencoder_forward.3} parent=1 // pred_check_branch
      %23 = sbr.rel (0) target = $region17
    $region16: #{_bayesian_autoencoder_forward.3} parent=1 // pred_region
      _
    $region17: #{_bayesian_autoencoder_forward.3} parent=1 // pred_fallthru
      _
    // Predicated region
    $region18: #{_bayesian_autoencoder_forward.3} parent=1 // pred_check
      _
    $region19: #{_bayesian_autoencoder_forward.3} parent=1 // pred_check_branch
      %25 = sbr.rel (0) target = $region21
    $region20: #{_bayesian_autoencoder_forward.3} parent=1 // pred_region
      _
    $region21: #{_bayesian_autoencoder_forward.3} parent=1 // pred_fallthru
      _
    // Predicated region
    $region22: #{_bayesian_autoencoder_forward.3} parent=1 // pred_check
      _
    $region23: #{_bayesian_autoencoder_forward.3} parent=1 // pred_check_branch
      %27 = sbr.rel (0) target = $region25
    $region24: #{_bayesian_autoencoder_forward.3} parent=1 // pred_region
      _
    $region25: #{_bayesian_autoencoder_forward.3} parent=1 // pred_fallthru
      _
    // Predicated region
    $region26: #{_bayesian_autoencoder_forward.3} parent=1 // pred_check
      _
    $region27: #{_bayesian_autoencoder_forward.3} parent=1 // pred_check_branch
      %29 = sbr.rel (0) target = $region29
    $region28: #{_bayesian_autoencoder_forward.3} parent=1 // pred_region
      _
    $region29: #{_bayesian_autoencoder_forward.3} parent=1 // pred_fallthru
      _
    %v30 = vld [vmem:[%s0] sm:$0xff]
    %v31 = vld [vmem:[%s1] sm:$0xff]
    %v32 = vld [vmem:[%s1 + $0x8] sm:$0xff]
    %v33 = vld [vmem:[%s1 + $0x10] sm:$0xff]
    %v34 = vld [vmem:[%s5] sm:$0xff]
    %v35 = vld [vmem:[%s5 + $0x8] sm:$0xff]
    %v36 = vld [vmem:[%s5 + $0x10] sm:$0xff]
    %38 = vset.pattern.permute.xlu0 0
    %39 = vperm.xlu0 %38, %v34
    %v40 = vpop.permute.xlu0 %39
    %43 = vset.pattern.permute.xlu0 0
    %44 = vperm.xlu0 %43, %v35
    %v45 = vpop.permute.xlu0 %44
    %48 = vset.pattern.permute.xlu0 0
    %49 = vperm.xlu0 %48, %v36
    %v50 = vpop.permute.xlu0 %49
    %vm52 = vcmask 64512
    %v54 = vsel %vm52, %v31, 0
    %v57 = vsel %vm52, %v32, 0
    %v60 = vsel %vm52, %v33, 0
    %62 = vmatprep.subr.mxu0 0.0
    %63 = vmatpush1.msra.mxu0 0.0
    %64 = vmatprep.subr.mxu0 0.0
    %65 = vmatpush1.msra.mxu0 0.0
    %66 = vmatprep.subr.mxu0 0.0
    %67 = vmatpush1.msra.mxu0 0.0
    %68 = vmatprep.subr.mxu0 0.0
    %69 = vmatpush1.msra.mxu0 0.0
    %70 = vmatprep.subr.mxu0 0.0
    %71 = vmatpush1.msra.mxu0 0.0
    %72 = vmatprep.subr.mxu0 0.0
    %73 = vmatpush1.msra.mxu0 0.0
    %74 = vmatprep.subr.mxu0 0.0
    %75 = vmatpush1.msra.mxu0 0.0
    %76 = vmatprep.subr.mxu0 0.0
    %77 = vmatpush1.msra.mxu0 0.0
    %78 = vmatprep.subr.mxu0 0.0
    %79 = vmatpush1.msra.mxu0 0.0
    %80 = vmatprep.subr.mxu0 0.0
    %81 = vmatpush1.msra.mxu0 0.0
    %82 = vmatprep.subr.mxu0 0.0
    %83 = vmatpush1.msra.mxu0 0.0
    %84 = vmatprep.subr.mxu0 0.0
    %85 = vmatpush1.msra.mxu0 0.0
    %86 = vmatprep.subr.mxu0 0.0
    %87 = vmatpush1.msra.mxu0 0.0
    %88 = vmatprep.subr.mxu0 0.0
    %89 = vmatpush1.msra.mxu0 0.0
    %90 = vmatprep.subr.mxu0 0.0
    %91 = vmatpush1.msra.mxu0 0.0
    %92 = vmatprep.subr.mxu0 0.0
    %93 = vmatpush1.msra.mxu0 %v30
    %94 = vmatprep.subr.mxu0 0.0
    %95 = vmatpush2.msra.mxu0 0.0
    %96 = vmatprep.subr.mxu0 0.0
    %97 = vmatpush2.msra.mxu0 0.0
    %98 = vmatprep.subr.mxu0 0.0
    %99 = vmatpush2.msra.mxu0 0.0
    %100 = vmatprep.subr.mxu0 0.0
    %101 = vmatpush2.msra.mxu0 0.0
    %102 = vmatprep.subr.mxu0 0.0
    %103 = vmatpush2.msra.mxu0 0.0
    %104 = vmatprep.subr.mxu0 0.0
    %105 = vmatpush2.msra.mxu0 0.0
    %106 = vmatprep.subr.mxu0 0.0
    %107 = vmatpush2.msra.mxu0 0.0
    %108 = vmatprep.subr.mxu0 0.0
    %109 = vmatpush2.msra.mxu0 0.0
    %110 = vmatprep.subr.mxu0 0.0
    %111 = vmatpush2.msra.mxu0 0.0
    %112 = vmatprep.subr.mxu0 0.0
    %113 = vmatpush2.msra.mxu0 0.0
    %114 = vmatprep.subr.mxu0 0.0
    %115 = vmatpush2.msra.mxu0 0.0
    %116 = vmatprep.subr.mxu0 0.0
    %117 = vmatpush2.msra.mxu0 0.0
    %118 = vmatprep.subr.mxu0 0.0
    %119 = vmatpush2.msra.mxu0 0.0
    %120 = vmatprep.subr.mxu0 0.0
    %121 = vmatpush2.msra.mxu0 0.0
    %122 = vmatprep.subr.mxu0 0.0
    %123 = vmatpush2.msra.mxu0 0.0
    %124 = vmatprep.subr.mxu0 0.0
    %125 = vmatpush2.msra.mxu0 0.0
    %126 = vmatprep.mubr.f32.mxu0 0.0
    %127 = vmatmul.mubr.f32.gmra.mxu0 %v54
    %v128 = vpop.f32.mrf.mxu0
    %v129 = vadd.f32 %v40, %v128
    %v130 = vpop.f32.mrf.mxu0
    %131 = vmatprep.mubr.f32.mxu0 0.0
    %132 = vmatmul.mubr.f32.gmra.mxu0 %v57
    %v133 = vpop.f32.mrf.mxu0
    %v134 = vadd.f32 %v45, %v133
    %v135 = vpop.f32.mrf.mxu0
    %136 = vmatprep.mubr.f32.mxu0 0.0
    %137 = vmatmul.mubr.f32.gmra.mxu0 %v60
    %v138 = vpop.f32.mrf.mxu0
    %v139 = vadd.f32 %v50, %v138
    %v140 = vpop.f32.mrf.mxu0
    %141 = vdwg.mxu0
    %v142 = vmax.f32 %v129, 0.0
    %v143 = vmax.f32 %v134, 0.0
    %v144 = vmax.f32 %v139, 0.0
    %v145 = vld [vmem:[%s2] sm:$0xff]
    %v146 = vld [vmem:[%s2 + $0x8] sm:$0xff]
    %v147 = vld [vmem:[%s2 + $0x10] sm:$0xff]
    %v148 = vld [vmem:[%s5 + $0x18] sm:$0xff]
    %v149 = vld [vmem:[%s5 + $0x20] sm:$0xff]
    %v150 = vld [vmem:[%s5 + $0x28] sm:$0xff]
    %152 = vset.pattern.permute.xlu0 0
    %153 = vperm.xlu0 %152, %v148
    %v154 = vpop.permute.xlu0 %153
    %157 = vset.pattern.permute.xlu0 0
    %158 = vperm.xlu0 %157, %v149
    %v159 = vpop.permute.xlu0 %158
    %162 = vset.pattern.permute.xlu0 0
    %163 = vperm.xlu0 %162, %v150
    %v164 = vpop.permute.xlu0 %163
    %vm166 = vcmask 195584
    %v168 = vsel %vm166, %v145, 0
    %v171 = vsel %vm166, %v146, 0
    %v174 = vsel %vm166, %v147, 0
    %176 = vmatprep.subr.mxu0 0.0
    %177 = vmatpush1.msra.mxu0 0.0
    %178 = vmatprep.subr.mxu0 0.0
    %179 = vmatpush1.msra.mxu0 0.0
    %180 = vmatprep.subr.mxu0 0.0
    %181 = vmatpush1.msra.mxu0 0.0
    %182 = vmatprep.subr.mxu0 0.0
    %183 = vmatpush1.msra.mxu0 0.0
    %184 = vmatprep.subr.mxu0 0.0
    %185 = vmatpush1.msra.mxu0 0.0
    %186 = vmatprep.subr.mxu0 0.0
    %187 = vmatpush1.msra.mxu0 0.0
    %188 = vmatprep.subr.mxu0 0.0
    %189 = vmatpush1.msra.mxu0 0.0
    %190 = vmatprep.subr.mxu0 0.0
    %191 = vmatpush1.msra.mxu0 0.0
    %192 = vmatprep.subr.mxu0 0.0
    %193 = vmatpush1.msra.mxu0 0.0
    %194 = vmatprep.subr.mxu0 0.0
    %195 = vmatpush1.msra.mxu0 0.0
    %196 = vmatprep.subr.mxu0 0.0
    %197 = vmatpush1.msra.mxu0 0.0
    %198 = vmatprep.subr.mxu0 0.0
    %199 = vmatpush1.msra.mxu0 0.0
    %200 = vmatprep.subr.mxu0 0.0
    %201 = vmatpush1.msra.mxu0 0.0
    %202 = vmatprep.subr.mxu0 0.0
    %203 = vmatpush1.msra.mxu0 %v144
    %204 = vmatprep.subr.mxu0 0.0
    %205 = vmatpush1.msra.mxu0 %v143
    %206 = vmatprep.subr.mxu0 0.0
    %207 = vmatpush1.msra.mxu0 %v142
    %208 = vmatprep.subr.mxu0 0.0
    %209 = vmatpush2.msra.mxu0 0.0
    %210 = vmatprep.subr.mxu0 0.0
    %211 = vmatpush2.msra.mxu0 0.0
    %212 = vmatprep.subr.mxu0 0.0
    %213 = vmatpush2.msra.mxu0 0.0
    %214 = vmatprep.subr.mxu0 0.0
    %215 = vmatpush2.msra.mxu0 0.0
    %216 = vmatprep.subr.mxu0 0.0
    %217 = vmatpush2.msra.mxu0 0.0
    %218 = vmatprep.subr.mxu0 0.0
    %219 = vmatpush2.msra.mxu0 0.0
    %220 = vmatprep.subr.mxu0 0.0
    %221 = vmatpush2.msra.mxu0 0.0
    %222 = vmatprep.subr.mxu0 0.0
    %223 = vmatpush2.msra.mxu0 0.0
    %224 = vmatprep.subr.mxu0 0.0
    %225 = vmatpush2.msra.mxu0 0.0
    %226 = vmatprep.subr.mxu0 0.0
    %227 = vmatpush2.msra.mxu0 0.0
    %228 = vmatprep.subr.mxu0 0.0
    %229 = vmatpush2.msra.mxu0 0.0
    %230 = vmatprep.subr.mxu0 0.0
    %231 = vmatpush2.msra.mxu0 0.0
    %232 = vmatprep.subr.mxu0 0.0
    %233 = vmatpush2.msra.mxu0 0.0
    %234 = vmatprep.subr.mxu0 0.0
    %235 = vmatpush2.msra.mxu0 0.0
    %236 = vmatprep.subr.mxu0 0.0
    %237 = vmatpush2.msra.mxu0 0.0
    %238 = vmatprep.subr.mxu0 0.0
    %239 = vmatpush2.msra.mxu0 0.0
    %240 = vmatprep.mubr.f32.mxu0 0.0
    %241 = vmatmul.mubr.f32.gmra.mxu0 %v168
    %v242 = vpop.f32.mrf.mxu0
    %v243 = vadd.f32 %v154, %v242
    %v244 = vpop.f32.mrf.mxu0
    %245 = vmatprep.mubr.f32.mxu0 0.0
    %246 = vmatmul.mubr.f32.gmra.mxu0 %v171
    %v247 = vpop.f32.mrf.mxu0
    %v248 = vadd.f32 %v159, %v247
    %v249 = vpop.f32.mrf.mxu0
    %250 = vmatprep.mubr.f32.mxu0 0.0
    %251 = vmatmul.mubr.f32.gmra.mxu0 %v174
    %v252 = vpop.f32.mrf.mxu0
    %v253 = vadd.f32 %v164, %v252
    %v254 = vpop.f32.mrf.mxu0
    %255 = vdwg.mxu0
    %v256 = vmax.f32 %v243, 0.0
    %v257 = vmax.f32 %v248, 0.0
    %v258 = vmax.f32 %v253, 0.0
    %v259 = vld [vmem:[%s3] sm:$0xff]
    %v260 = vld [vmem:[%s3 + $0x8] sm:$0xff]
    %v261 = vld [vmem:[%s3 + $0x10] sm:$0xff]
    %v262 = vld [vmem:[%s5 + $0x30] sm:$0xff]
    %v263 = vld [vmem:[%s5 + $0x38] sm:$0xff]
    %v264 = vld [vmem:[%s5 + $0x40] sm:$0xff]
    %266 = vset.pattern.permute.xlu0 0
    %267 = vperm.xlu0 %266, %v262
    %v268 = vpop.permute.xlu0 %267
    %271 = vset.pattern.permute.xlu0 0
    %272 = vperm.xlu0 %271, %v263
    %v273 = vpop.permute.xlu0 %272
    %276 = vset.pattern.permute.xlu0 0
    %277 = vperm.xlu0 %276, %v264
    %v278 = vpop.permute.xlu0 %277
    %v281 = vsel %vm166, %v259, 0
    %v284 = vsel %vm166, %v260, 0
    %v287 = vsel %vm166, %v261, 0
    %289 = vmatprep.subr.mxu0 0.0
    %290 = vmatpush1.msra.mxu0 0.0
    %291 = vmatprep.subr.mxu0 0.0
    %292 = vmatpush1.msra.mxu0 0.0
    %293 = vmatprep.subr.mxu0 0.0
    %294 = vmatpush1.msra.mxu0 0.0
    %295 = vmatprep.subr.mxu0 0.0
    %296 = vmatpush1.msra.mxu0 0.0
    %297 = vmatprep.subr.mxu0 0.0
    %298 = vmatpush1.msra.mxu0 0.0
    %299 = vmatprep.subr.mxu0 0.0
    %300 = vmatpush1.msra.mxu0 0.0
    %301 = vmatprep.subr.mxu0 0.0
    %302 = vmatpush1.msra.mxu0 0.0
    %303 = vmatprep.subr.mxu0 0.0
    %304 = vmatpush1.msra.mxu0 0.0
    %305 = vmatprep.subr.mxu0 0.0
    %306 = vmatpush1.msra.mxu0 0.0
    %307 = vmatprep.subr.mxu0 0.0
    %308 = vmatpush1.msra.mxu0 0.0
    %309 = vmatprep.subr.mxu0 0.0
    %310 = vmatpush1.msra.mxu0 0.0
    %311 = vmatprep.subr.mxu0 0.0
    %312 = vmatpush1.msra.mxu0 0.0
    %313 = vmatprep.subr.mxu0 0.0
    %314 = vmatpush1.msra.mxu0 0.0
    %315 = vmatprep.subr.mxu0 0.0
    %316 = vmatpush1.msra.mxu0 %v258
    %317 = vmatprep.subr.mxu0 0.0
    %318 = vmatpush1.msra.mxu0 %v257
    %319 = vmatprep.subr.mxu0 0.0
    %320 = vmatpush1.msra.mxu0 %v256
    %321 = vmatprep.subr.mxu0 0.0
    %322 = vmatpush2.msra.mxu0 0.0
    %323 = vmatprep.subr.mxu0 0.0
    %324 = vmatpush2.msra.mxu0 0.0
    %325 = vmatprep.subr.mxu0 0.0
    %326 = vmatpush2.msra.mxu0 0.0
    %327 = vmatprep.subr.mxu0 0.0
    %328 = vmatpush2.msra.mxu0 0.0
    %329 = vmatprep.subr.mxu0 0.0
    %330 = vmatpush2.msra.mxu0 0.0
    %331 = vmatprep.subr.mxu0 0.0
    %332 = vmatpush2.msra.mxu0 0.0
    %333 = vmatprep.subr.mxu0 0.0
    %334 = vmatpush2.msra.mxu0 0.0
    %335 = vmatprep.subr.mxu0 0.0
    %336 = vmatpush2.msra.mxu0 0.0
    %337 = vmatprep.subr.mxu0 0.0
    %338 = vmatpush2.msra.mxu0 0.0
    %339 = vmatprep.subr.mxu0 0.0
    %340 = vmatpush2.msra.mxu0 0.0
    %341 = vmatprep.subr.mxu0 0.0
    %342 = vmatpush2.msra.mxu0 0.0
    %343 = vmatprep.subr.mxu0 0.0
    %344 = vmatpush2.msra.mxu0 0.0
    %345 = vmatprep.subr.mxu0 0.0
    %346 = vmatpush2.msra.mxu0 0.0
    %347 = vmatprep.subr.mxu0 0.0
    %348 = vmatpush2.msra.mxu0 0.0
    %349 = vmatprep.subr.mxu0 0.0
    %350 = vmatpush2.msra.mxu0 0.0
    %351 = vmatprep.subr.mxu0 0.0
    %352 = vmatpush2.msra.mxu0 0.0
    %353 = vmatprep.mubr.f32.mxu0 0.0
    %354 = vmatmul.mubr.f32.gmra.mxu0 %v281
    %v355 = vpop.f32.mrf.mxu0
    %v356 = vadd.f32 %v268, %v355
    %v357 = vpop.f32.mrf.mxu0
    %358 = vmatprep.mubr.f32.mxu0 0.0
    %359 = vmatmul.mubr.f32.gmra.mxu0 %v284
    %v360 = vpop.f32.mrf.mxu0
    %v361 = vadd.f32 %v273, %v360
    %v362 = vpop.f32.mrf.mxu0
    %363 = vmatprep.mubr.f32.mxu0 0.0
    %364 = vmatmul.mubr.f32.gmra.mxu0 %v287
    %v365 = vpop.f32.mrf.mxu0
    %v366 = vadd.f32 %v278, %v365
    %v367 = vpop.f32.mrf.mxu0
    %368 = vdwg.mxu0
    %v369 = vmax.f32 %v356, 0.0
    %v370 = vmax.f32 %v361, 0.0
    %v371 = vmax.f32 %v366, 0.0
    %v372 = vld [vmem:[%s4] sm:$0xff]
    %v373 = vld [vmem:[%s5 + $0x48] sm:$0xff]
    %375 = vset.pattern.permute.xlu0 0
    %376 = vperm.xlu0 %375, %v373
    %v377 = vpop.permute.xlu0 %376
    %v380 = vsel %vm166, %v372, 0
    %382 = vmatprep.subr.mxu0 0.0
    %383 = vmatpush1.msra.mxu0 0.0
    %384 = vmatprep.subr.mxu0 0.0
    %385 = vmatpush1.msra.mxu0 0.0
    %386 = vmatprep.subr.mxu0 0.0
    %387 = vmatpush1.msra.mxu0 0.0
    %388 = vmatprep.subr.mxu0 0.0
    %389 = vmatpush1.msra.mxu0 0.0
    %390 = vmatprep.subr.mxu0 0.0
    %391 = vmatpush1.msra.mxu0 0.0
    %392 = vmatprep.subr.mxu0 0.0
    %393 = vmatpush1.msra.mxu0 0.0
    %394 = vmatprep.subr.mxu0 0.0
    %395 = vmatpush1.msra.mxu0 0.0
    %396 = vmatprep.subr.mxu0 0.0
    %397 = vmatpush1.msra.mxu0 0.0
    %398 = vmatprep.subr.mxu0 0.0
    %399 = vmatpush1.msra.mxu0 0.0
    %400 = vmatprep.subr.mxu0 0.0
    %401 = vmatpush1.msra.mxu0 0.0
    %402 = vmatprep.subr.mxu0 0.0
    %403 = vmatpush1.msra.mxu0 0.0
    %404 = vmatprep.subr.mxu0 0.0
    %405 = vmatpush1.msra.mxu0 0.0
    %406 = vmatprep.subr.mxu0 0.0
    %407 = vmatpush1.msra.mxu0 0.0
    %408 = vmatprep.subr.mxu0 0.0
    %409 = vmatpush1.msra.mxu0 %v371
    %410 = vmatprep.subr.mxu0 0.0
    %411 = vmatpush1.msra.mxu0 %v370
    %412 = vmatprep.subr.mxu0 0.0
    %413 = vmatpush1.msra.mxu0 %v369
    %414 = vmatprep.subr.mxu0 0.0
    %415 = vmatpush2.msra.mxu0 0.0
    %416 = vmatprep.subr.mxu0 0.0
    %417 = vmatpush2.msra.mxu0 0.0
    %418 = vmatprep.subr.mxu0 0.0
    %419 = vmatpush2.msra.mxu0 0.0
    %420 = vmatprep.subr.mxu0 0.0
    %421 = vmatpush2.msra.mxu0 0.0
    %422 = vmatprep.subr.mxu0 0.0
    %423 = vmatpush2.msra.mxu0 0.0
    %424 = vmatprep.subr.mxu0 0.0
    %425 = vmatpush2.msra.mxu0 0.0
    %426 = vmatprep.subr.mxu0 0.0
    %427 = vmatpush2.msra.mxu0 0.0
    %428 = vmatprep.subr.mxu0 0.0
    %429 = vmatpush2.msra.mxu0 0.0
    %430 = vmatprep.subr.mxu0 0.0
    %431 = vmatpush2.msra.mxu0 0.0
    %432 = vmatprep.subr.mxu0 0.0
    %433 = vmatpush2.msra.mxu0 0.0
    %434 = vmatprep.subr.mxu0 0.0
    %435 = vmatpush2.msra.mxu0 0.0
    %436 = vmatprep.subr.mxu0 0.0
    %437 = vmatpush2.msra.mxu0 0.0
    %438 = vmatprep.subr.mxu0 0.0
    %439 = vmatpush2.msra.mxu0 0.0
    %440 = vmatprep.subr.mxu0 0.0
    %441 = vmatpush2.msra.mxu0 0.0
    %442 = vmatprep.subr.mxu0 0.0
    %443 = vmatpush2.msra.mxu0 0.0
    %444 = vmatprep.subr.mxu0 0.0
    %445 = vmatpush2.msra.mxu0 0.0
    %446 = vmatprep.mubr.f32.mxu0 0.0
    %447 = vmatmul.mubr.f32.gmra.mxu0 %v380
    %v448 = vpop.f32.mrf.mxu0
    %v449 = vadd.f32 %v377, %v448
    %v450 = vpop.f32.mrf.mxu0
    %451 = vdwg.mxu0
    %v452 = vxor.u32 %v449, 2147483648
    %v453 = vmul.f32 %v452, 1.442695
    %v454 = vpow.pop %v453
    %v455 = vadd.f32 %v454, 1.0
    %v456 = vrcp.pop %v455
    %v457 = vmul.f32 1.0, %v456
    %v458 = vmul.f32 %v457, 1.2
    %v459 = vsub.f32 %v458, 0.1
    %vm460 = vcmask 130048
    %461 = vst.msk [vmem:[#allocation2] sm:$0xff] %vm460, %v459
    %v462 = vld [vmem:[%s6] sm:$0xff]
    %v463 = vrsqrt.pop %v462
    %464 = vst.msk [vmem:[#allocation4] sm:$0xff] %vm460, %v463
    // Predicated region
    $region30: #{_bayesian_autoencoder_forward.3} parent=1 // pred_check
      _
    $region31: #{_bayesian_autoencoder_forward.3} parent=1 // pred_check_branch
      %466 = sbr.rel (0) target = $region33
    $region32: #{_bayesian_autoencoder_forward.3} parent=1 // pred_region
      %s468 = ssub.s32 128, 128
      %469 = vsyncadd [#allocation3], %s468
      %s471 = sshll.u32 [#allocation2], 4
      %s472 = int_to_ptr.vmem [resolvable:$true] %s471
      %474 = dma.vmem_to_hbm [thread:$0]  %s472, 128, %s7, [#allocation3]
    $region33: #{_bayesian_autoencoder_forward.3} parent=1 // pred_fallthru
      _
    // Predicated region
    $region34: #{_bayesian_autoencoder_forward.3} parent=1 // pred_check
      _
    $region35: #{_bayesian_autoencoder_forward.3} parent=1 // pred_check_branch
      %476 = sbr.rel (0) target = $region37
    $region36: #{_bayesian_autoencoder_forward.3} parent=1 // pred_region
      %s478 = ssub.s32 128, 128
      %479 = vsyncadd [#allocation5], %s478
      %s481 = sshll.u32 [#allocation4], 4
      %s482 = int_to_ptr.vmem [resolvable:$true] %s481
      %484 = dma.vmem_to_hbm [thread:$0]  %s482, 128, %s8, [#allocation5]
    $region37: #{_bayesian_autoencoder_forward.3} parent=1 // pred_fallthru
      _
    // Predicated region
    $region38: #{_bayesian_autoencoder_forward.3} parent=1 // pred_check
      _
    $region39: #{_bayesian_autoencoder_forward.3} parent=1 // pred_check_branch
      %486 = sbr.rel (0) target = $region41
    $region40: #{_bayesian_autoencoder_forward.3} parent=1 // pred_region
      %487 = dma.done [#allocation3], 128
    $region41: #{_bayesian_autoencoder_forward.3} parent=1 // pred_fallthru
      _
    // Predicated region
    $region42: #{_bayesian_autoencoder_forward.3} parent=1 // pred_check
      _
    $region43: #{_bayesian_autoencoder_forward.3} parent=1 // pred_check_branch
      %489 = sbr.rel (0) target = $region45
    $region44: #{_bayesian_autoencoder_forward.3} parent=1 // pred_region
      %490 = dma.done [#allocation5], 128
    $region45: #{_bayesian_autoencoder_forward.3} parent=1 // pred_fallthru
      _
    %491 = vsyncpa [#allocation3], 1
    %492 = vsyncpa [#allocation5], 1

</llo_original>
